<compile_context>
chip_gen: v6e
topology: v6e:2x2x1
jax: 0.10.0
libtpu: 0.0.40
codegen_flags: <defaults>
</compile_context>

<pallas_src>
import jax
import jax.numpy as jnp
from jax.experimental import pallas as pl
from jax.experimental.pallas import tpu as pltpu

_LN_EPS = 1e-12


def _lxmert_output_kernel(x_ref, w_ref, p_ref, res_ref, o_ref):
    # x_ref:   (TM, I)   intermediate activations
    # w_ref:   (H, I)    PyTorch Linear layout (out_features, in_features)
    # p_ref:   (3, H)    row 0 = bias, row 1 = LN gamma, row 2 = LN beta (fp32)
    # res_ref: (TM, H)   residual input_tensor
    # o_ref:   (TM, H)
    y = jax.lax.dot_general(
        x_ref[...], w_ref[...],
        dimension_numbers=(((1,), (1,)), ((), ())),   # contract on in_features
        preferred_element_type=jnp.float32,
    )                                                 # (TM, H), fp32 accumulate

    bias = p_ref[0:1, :]
    gamma = p_ref[1:2, :]
    beta = p_ref[2:3, :]

    y = y + bias + res_ref[...].astype(jnp.float32)
    # TODO(synk): dropout omitted (inference / eval mode -> identity).

    # Two-pass (centered) LayerNorm for fp32 accuracy vs. torch reference.
    mean = jnp.mean(y, axis=-1, keepdims=True)
    centered = y - mean
    var = jnp.mean(centered * centered, axis=-1, keepdims=True)
    inv = jax.lax.rsqrt(var + _LN_EPS)
    out = centered * inv * gamma + beta
    o_ref[...] = out.astype(o_ref.dtype)


def _round_up(x, m):
    return ((x + m - 1) // m) * m


def lxmert_output(hidden_states, input_tensor, weight, bias, ln_weight, ln_bias,
                  *, tile_m=256, matmul_dtype=None):
    """hidden_states: (B, S, I)   output of the intermediate layer
       input_tensor:  (B, S, H)   residual input
       weight:        (H, I)      PyTorch Linear layout (out_features, in_features)
       bias, ln_weight, ln_bias:  (H,)
       returns:       (B, S, H)
    """
    B, S, I = hidden_states.shape
    H = weight.shape[0]
    M = B * S

    x2d = hidden_states.reshape(M, I)
    r2d = input_tensor.reshape(M, H)

    if matmul_dtype is not None:           # e.g. jnp.bfloat16 on v6e/v7x
        x2d = x2d.astype(matmul_dtype)
        weight = weight.astype(matmul_dtype)

    # M tile: large enough to feed the MXU rows, multiple of 8 (sublane), but never
    # larger than the (rounded-up) problem size.  Pad M so the grid divides evenly.
    tm = _round_up(min(max(tile_m, 8), _round_up(M, 8)), 8)
    m_pad = _round_up(M, tm)
    if m_pad != M:
        x2d = jnp.pad(x2d, ((0, m_pad - M), (0, 0)))
        r2d = jnp.pad(r2d, ((0, m_pad - M), (0, 0)))

    # Pack bias / gamma / beta into a single (3, H) fp32 slab (one small DMA).
    params = jnp.stack([bias.astype(jnp.float32),
                        ln_weight.astype(jnp.float32),
                        ln_bias.astype(jnp.float32)], axis=0)        # (3, H)

    x_itemsize = jnp.dtype(x2d.dtype).itemsize
    w_itemsize = jnp.dtype(weight.dtype).itemsize
    r_itemsize = jnp.dtype(r2d.dtype).itemsize
    o_itemsize = jnp.dtype(input_tensor.dtype).itemsize
    # double-buffered x / residual / output tiles + (conservatively 2x) resident
    # weight + packed param slab (padded to 8 sublanes).
    vmem_est = (2 * tm * I * x_itemsize        # activations (2 bufs)
                + 2 * tm * H * r_itemsize      # residual    (2 bufs)
                + 2 * tm * H * o_itemsize      # output      (2 bufs)
                + 2 * H * I * w_itemsize       # resident weight (conservative 2x)
                + 2 * 8 * H * 4)               # packed bias/gamma/beta
    vmem_limit = int(min(64 * 2**20, max(16 * 2**20, 2 * vmem_est)))

    cost = pl.CostEstimate(
        flops=int(2 * m_pad * I * H + 10 * m_pad * H),     # matmul + LN epilogue
        transcendentals=int(m_pad),                         # one rsqrt per row
        bytes_accessed=int(m_pad * I * x_itemsize + H * I * w_itemsize
                           + m_pad * H * r_itemsize        # residual read
                           + m_pad * H * o_itemsize),      # output write
    )

    out2d = pl.pallas_call(
        _lxmert_output_kernel,
        out_shape=jax.ShapeDtypeStruct((m_pad, H), input_tensor.dtype),
        grid_spec=pltpu.PrefetchScalarGridSpec(
            num_scalar_prefetch=0,
            grid=(m_pad // tm,),
            in_specs=[
                pl.BlockSpec((tm, I), lambda i: (i, 0)),   # activations
                pl.BlockSpec((H, I), lambda i: (0, 0)),    # weight (resident)
                pl.BlockSpec((3, H), lambda i: (0, 0)),    # bias / gamma / beta
                pl.BlockSpec((tm, H), lambda i: (i, 0)),   # residual input
            ],
            out_specs=pl.BlockSpec((tm, H), lambda i: (i, 0)),
        ),
        compiler_params=pltpu.CompilerParams(
            dimension_semantics=("parallel",),
            vmem_limit_bytes=vmem_limit,
        ),
        cost_estimate=cost,
    )(x2d, weight, params, r2d)

    return out2d[:M].reshape(B, S, H)


def _reference(hidden_states, input_tensor, weight, bias, ln_weight, ln_bias):
    y = jnp.einsum("bsi,hi->bsh", hidden_states, weight) + bias
    y = y + input_tensor
    mean = jnp.mean(y, axis=-1, keepdims=True)
    var = jnp.mean(jnp.square(y - mean), axis=-1, keepdims=True)
    return (y - mean) * jax.lax.rsqrt(var + _LN_EPS) * ln_weight + ln_bias


if __name__ == "__main__":
    # Small config: intermediate_size=128, hidden_size=64, batch=2, seq=8
    B, S, I, H = 2, 8, 128, 64

    key = jax.random.PRNGKey(0)
    k_x, k_r, k_w, k_b, k_g, k_bt = jax.random.split(key, 6)

    hidden_states = jax.random.normal(k_x, (B, S, I), dtype=jnp.float32)
    input_tensor = jax.random.normal(k_r, (B, S, H), dtype=jnp.float32)
    weight = jax.random.normal(k_w, (H, I), dtype=jnp.float32) * 0.02
    bias = jax.random.normal(k_b, (H,), dtype=jnp.float32) * 0.02
    ln_weight = 1.0 + 0.1 * jax.random.normal(k_g, (H,), dtype=jnp.float32)
    ln_bias = 0.1 * jax.random.normal(k_bt, (H,), dtype=jnp.float32)

    out = lxmert_output(hidden_states, input_tensor, weight, bias, ln_weight, ln_bias)
    out = jax.block_until_ready(out)

    ref = _reference(hidden_states, input_tensor, weight, bias, ln_weight, ln_bias)
    assert out.shape == (B, S, H)
    assert jnp.allclose(out, ref, atol=1e-5, rtol=1e-5), "mismatch vs reference"

    print("KERNEL_OK")
</pallas_src>

<mosaic_0001>
module attributes {stable_mosaic.version = 11 : i64} {
  func.func @_lxmert_output_kernel(%arg0: i32, %arg1: memref<16x128xf32, #tpu.memory_space<vmem>>, %arg2: memref<64x128xf32, #tpu.memory_space<vmem>>, %arg3: memref<3x64xf32, #tpu.memory_space<vmem>>, %arg4: memref<16x64xf32, #tpu.memory_space<vmem>>, %arg5: memref<16x64xf32, #tpu.memory_space<vmem>>) attributes {dimension_semantics = [#tpu.dimension_semantics<parallel>], iteration_bounds = array<i64: 1>, scalar_prefetch = 0 : i64, scratch_operands = 0 : i64, tpu.core_type = #tpu.core_type<tc>, window_params = [{transform_indices = @transform_0, window_bounds = array<i64: 16, 128>}, {pipeline_mode = #tpu.pipeline_mode<synchronous>, transform_indices = @transform_1, window_bounds = array<i64: 64, 128>}, {pipeline_mode = #tpu.pipeline_mode<synchronous>, transform_indices = @transform_2, window_bounds = array<i64: 3, 64>}, {transform_indices = @transform_3, window_bounds = array<i64: 16, 64>}, {transform_indices = @transform_4, window_bounds = array<i64: 16, 64>}]} {
    %c0 = arith.constant 0 : index
    %c0_0 = arith.constant 0 : index
    %0 = vector.load %arg1[%c0, %c0_0] : memref<16x128xf32, #tpu.memory_space<vmem>>, vector<16x128xf32>
    %c0_1 = arith.constant 0 : index
    %c0_2 = arith.constant 0 : index
    %1 = vector.load %arg2[%c0_1, %c0_2] : memref<64x128xf32, #tpu.memory_space<vmem>>, vector<64x128xf32>
    %cst = arith.constant dense<0.000000e+00> : vector<16x64xf32>
    %2 = tpu.matmul %0, %1, %cst {dimension_numbers = #tpu.dot_dimension_numbers<[1], [1], [0], [0], [0, 0, 1, 0], [], []>} : vector<16x128xf32>, vector<64x128xf32>, vector<16x64xf32> -> vector<16x64xf32>
    %c0_3 = arith.constant 0 : index
    %c0_4 = arith.constant 0 : index
    %3 = vector.load %arg3[%c0_3, %c0_4] : memref<3x64xf32, #tpu.memory_space<vmem>>, vector<1x64xf32>
    %c1 = arith.constant 1 : index
    %c0_5 = arith.constant 0 : index
    %4 = vector.load %arg3[%c1, %c0_5] : memref<3x64xf32, #tpu.memory_space<vmem>>, vector<1x64xf32>
    %c2 = arith.constant 2 : index
    %c0_6 = arith.constant 0 : index
    %5 = vector.load %arg3[%c2, %c0_6] : memref<3x64xf32, #tpu.memory_space<vmem>>, vector<1x64xf32>
    %6 = vector.broadcast %3 : vector<1x64xf32> to vector<16x64xf32>
    %7 = arith.addf %2, %6 : vector<16x64xf32>
    %c0_7 = arith.constant 0 : index
    %c0_8 = arith.constant 0 : index
    %8 = vector.load %arg4[%c0_7, %c0_8] : memref<16x64xf32, #tpu.memory_space<vmem>>, vector<16x64xf32>
    %9 = arith.addf %7, %8 : vector<16x64xf32>
    %cst_9 = arith.constant dense<0.000000e+00> : vector<16xf32>
    %10 = vector.multi_reduction <add>, %9, %cst_9 [1] : vector<16x64xf32> to vector<16xf32>
    %11 = vector.shape_cast %10 : vector<16xf32> to vector<16x1xf32>
    %cst_10 = arith.constant 6.400000e+01 : f32
    %12 = vector.broadcast %cst_10 : f32 to vector<16x1xf32>
    %13 = arith.divf %11, %12 : vector<16x1xf32>
    %14 = vector.broadcast %13 : vector<16x1xf32> to vector<16x64xf32>
    %15 = arith.subf %9, %14 : vector<16x64xf32>
    %16 = arith.mulf %15, %15 : vector<16x64xf32>
    %cst_11 = arith.constant dense<0.000000e+00> : vector<16xf32>
    %17 = vector.multi_reduction <add>, %16, %cst_11 [1] : vector<16x64xf32> to vector<16xf32>
    %18 = vector.shape_cast %17 : vector<16xf32> to vector<16x1xf32>
    %cst_12 = arith.constant 6.400000e+01 : f32
    %19 = vector.broadcast %cst_12 : f32 to vector<16x1xf32>
    %20 = arith.divf %18, %19 : vector<16x1xf32>
    %cst_13 = arith.constant 9.99999996E-13 : f32
    %21 = vector.broadcast %cst_13 : f32 to vector<16x1xf32>
    %22 = arith.addf %20, %21 : vector<16x1xf32>
    %23 = math.rsqrt %22 : vector<16x1xf32>
    %24 = vector.broadcast %23 : vector<16x1xf32> to vector<16x64xf32>
    %25 = arith.mulf %15, %24 : vector<16x64xf32>
    %26 = vector.broadcast %4 : vector<1x64xf32> to vector<16x64xf32>
    %27 = arith.mulf %25, %26 : vector<16x64xf32>
    %28 = vector.broadcast %5 : vector<1x64xf32> to vector<16x64xf32>
    %29 = arith.addf %27, %28 : vector<16x64xf32>
    %c0_14 = arith.constant 0 : index
    %c0_15 = arith.constant 0 : index
    %30 = vector.load %arg5[%c0_14, %c0_15] : memref<16x64xf32, #tpu.memory_space<vmem>>, vector<16x64xf32>
    tpu.vector_store %arg5[%c0_14, %c0_15], %29 {strides = array<i32>} : memref<16x64xf32, #tpu.memory_space<vmem>>, vector<16x64xf32>,
    return
  }
  func.func @transform_0(%arg0: i32) -> (i32, i32) {
    %c0_i32 = arith.constant 0 : i32
    %c0_i32_0 = arith.constant 0 : i32
    return %arg0, %c0_i32 : i32, i32
  }
  func.func @transform_1(%arg0: i32) -> (i32, i32) {
    %c0_i32 = arith.constant 0 : i32
    %c0_i32_0 = arith.constant 0 : i32
    %c0_i32_1 = arith.constant 0 : i32
    return %c0_i32, %c0_i32_0 : i32, i32
  }
  func.func @transform_2(%arg0: i32) -> (i32, i32) {
    %c0_i32 = arith.constant 0 : i32
    %c0_i32_0 = arith.constant 0 : i32
    %c0_i32_1 = arith.constant 0 : i32
    return %c0_i32, %c0_i32_0 : i32, i32
  }
  func.func @transform_3(%arg0: i32) -> (i32, i32) {
    %c0_i32 = arith.constant 0 : i32
    %c0_i32_0 = arith.constant 0 : i32
    return %arg0, %c0_i32 : i32, i32
  }
  func.func @transform_4(%arg0: i32) -> (i32, i32) {
    %c0_i32 = arith.constant 0 : i32
    %c0_i32_0 = arith.constant 0 : i32
    return %arg0, %c0_i32 : i32, i32
  }
}

</mosaic_0001>

<llo_original>
// kernel: tpu_custom_call.1
$region0: #{tpu_custom_call.1}
  #allocation0 [shape = 'u32[]', space=smem, size = 0x4, offset = 0x4, fixed_abs, tag = 'smem constant byte address 0x4 - core index']
  #allocation1 [shape = 'u32[144,128]{1,0:T(1,128)}', space=vmem, size = 0x12000, scoped, tag = 'internal scratch']
  %s0 = inlined_call_operand.hbm [shape: f32[16,128], index: 0, kind: input, shape index: {}]
  %s1 = inlined_call_operand.hbm [shape: f32[64,128], index: 1, kind: input, shape index: {}]
  %s2 = inlined_call_operand.hbm [shape: f32[3,64], index: 2, kind: input, shape index: {}]
  %s3 = inlined_call_operand.hbm [shape: f32[16,64], index: 3, kind: input, shape index: {}]
  %s4 = inlined_call_operand.hbm [shape: f32[16,64], index: 4, kind: output, shape index: {}]
  %s5 = sld [smem:[#allocation0]]
  $region42: #{tpu_custom_call.1} parent=0
    _
  %s7 = ssub.s32 1, %s5
  %s8 = scalar_select 0, %s7, %s5
  $region1: #{tpu_custom_call.1} parent=0
    #allocation2 [shape = 'u8[8192]{0}', space=vmem, size = 0x2000, scoped, tag = 'input window, operand 0, single buffered']
    #allocation3 [shape = 's32[1]{0}', space=sflag, size = 0x4, scoped, tag = 'scoped memory for tpu_custom_call.1']
    #allocation4 [shape = 's32[1]{0}', space=sflag, size = 0x4, scoped, tag = 'scoped memory for tpu_custom_call.1']
    #allocation5 [shape = 'u8[32768]{0}', space=vmem, size = 0x8000, scoped, tag = 'input window, operand 1, single buffered']
    #allocation6 [shape = 's32[1]{0}', space=sflag, size = 0x4, scoped, tag = 'scoped memory for tpu_custom_call.1']
    #allocation7 [shape = 'u8[2048]{0}', space=vmem, size = 0x800, scoped, tag = 'input window, operand 2, single buffered']
    #allocation8 [shape = 'u8[8192]{0}', space=vmem, size = 0x2000, scoped, tag = 'input window, operand 3, single buffered']
    #allocation9 [shape = 's32[1]{0}', space=sflag, size = 0x4, scoped, tag = 'scoped memory for tpu_custom_call.1']
    #allocation10 [shape = 'u8[8192]{0}', space=vmem, size = 0x2000, scoped, tag = 'output window, operand 0, single buffered']
    %9 = vsyncpa [#allocation3], 0
    %10 = vsyncpa [#allocation6], 0
    %11 = vsyncpa [#allocation9], 0
    %12 = vsyncpa [#allocation4], 0
    // Predicated region
    $region2: #{tpu_custom_call.1} parent=1 // pred_check
      _
    $region3: #{tpu_custom_call.1} parent=1 // pred_check_branch
      %14 = sbr.rel (0) target = $region5
    $region4: #{tpu_custom_call.1} parent=1 // pred_region
      %s16 = ssub.s32 256, 256
      %17 = vsyncadd [#allocation3], %s16
      %s18 = sshll.u32 [#allocation2], 4
      %s19 = int_to_ptr.vmem [resolvable:$true] %s18
      %24 = dma.hbm_to_vmem [thread:$0]  %s0, 256, %s19, [#allocation3], 128, 128, 8
    $region5: #{tpu_custom_call.1} parent=1 // pred_fallthru
      _
    // Predicated region
    $region6: #{tpu_custom_call.1} parent=1 // pred_check
      _
    $region7: #{tpu_custom_call.1} parent=1 // pred_check_branch
      %26 = sbr.rel (0) target = $region9
    $region8: #{tpu_custom_call.1} parent=1 // pred_region
      %s28 = ssub.s32 1024, 1024
      %29 = vsyncadd [#allocation6], %s28
      %s30 = sshll.u32 [#allocation5], 4
      %s31 = int_to_ptr.vmem [resolvable:$true] %s30
      %36 = dma.hbm_to_vmem [thread:$0]  %s1, 1024, %s31, [#allocation6], 128, 128, 8
    $region9: #{tpu_custom_call.1} parent=1 // pred_fallthru
      _
    // Predicated region
    $region10: #{tpu_custom_call.1} parent=1 // pred_check
      _
    $region11: #{tpu_custom_call.1} parent=1 // pred_check_branch
      %38 = sbr.rel (0) target = $region13
    $region12: #{tpu_custom_call.1} parent=1 // pred_region
      %s40 = ssub.s32 64, 64
      %41 = vsyncadd [#allocation6], %s40
      %s43 = sshll.u32 [#allocation7], 4
      %s44 = int_to_ptr.vmem [resolvable:$true] %s43
      %46 = dma.hbm_to_vmem [thread:$0]  %s2, 64, %s44, [#allocation6]
    $region13: #{tpu_custom_call.1} parent=1 // pred_fallthru
      _
    // Predicated region
    $region14: #{tpu_custom_call.1} parent=1 // pred_check
      _
    $region15: #{tpu_custom_call.1} parent=1 // pred_check_branch
      %48 = sbr.rel (0) target = $region17
    $region16: #{tpu_custom_call.1} parent=1 // pred_region
      %s50 = ssub.s32 256, 256
      %51 = vsyncadd [#allocation9], %s50
      %s52 = sshll.u32 [#allocation8], 4
      %s53 = int_to_ptr.vmem [resolvable:$true] %s52
      %58 = dma.hbm_to_vmem [thread:$0]  %s3, 256, %s53, [#allocation9], 128, 128, 8
    $region17: #{tpu_custom_call.1} parent=1 // pred_fallthru
      _
    // Predicated region
    $region18: #{tpu_custom_call.1} parent=1 // pred_check
      _
    $region19: #{tpu_custom_call.1} parent=1 // pred_check_branch
      %60 = sbr.rel (0) target = $region21
    $region20: #{tpu_custom_call.1} parent=1 // pred_region
      %61 = dma.done [#allocation3], 256
    $region21: #{tpu_custom_call.1} parent=1 // pred_fallthru
      _
    // Predicated region
    $region22: #{tpu_custom_call.1} parent=1 // pred_check
      _
    $region23: #{tpu_custom_call.1} parent=1 // pred_check_branch
      %63 = sbr.rel (0) target = $region25
    $region24: #{tpu_custom_call.1} parent=1 // pred_region
      %64 = dma.done [#allocation6], 1024
    $region25: #{tpu_custom_call.1} parent=1 // pred_fallthru
      _
    // Predicated region
    $region26: #{tpu_custom_call.1} parent=1 // pred_check
      _
    $region27: #{tpu_custom_call.1} parent=1 // pred_check_branch
      %66 = sbr.rel (0) target = $region29
    $region28: #{tpu_custom_call.1} parent=1 // pred_region
      %67 = dma.done [#allocation6], 64
    $region29: #{tpu_custom_call.1} parent=1 // pred_fallthru
      _
    // Predicated region
    $region30: #{tpu_custom_call.1} parent=1 // pred_check
      _
    $region31: #{tpu_custom_call.1} parent=1 // pred_check_branch
      %69 = sbr.rel (0) target = $region33
    $region32: #{tpu_custom_call.1} parent=1 // pred_region
      %70 = dma.done [#allocation9], 256
    $region33: #{tpu_custom_call.1} parent=1 // pred_fallthru
      _
    %v71 = vld [vmem:[#allocation2] sm:$0xff]
    %v72 = vld [vmem:[#allocation2 + $0x8] sm:$0xff]
    %v73 = vld [vmem:[#allocation5] sm:$0xff]
    %v74 = vld [vmem:[#allocation5 + $0x8] sm:$0xff]
    %v75 = vld [vmem:[#allocation5 + $0x10] sm:$0xff]
    %v76 = vld [vmem:[#allocation5 + $0x18] sm:$0xff]
    %v77 = vld [vmem:[#allocation5 + $0x20] sm:$0xff]
    %v78 = vld [vmem:[#allocation5 + $0x28] sm:$0xff]
    %v79 = vld [vmem:[#allocation5 + $0x30] sm:$0xff]
    %v80 = vld [vmem:[#allocation5 + $0x38] sm:$0xff]
    %v81 = vld [vmem:[#allocation7] sm:$0x1]
    %v82 = vld [vmem:[#allocation7 + $0x1] sm:$0x1]
    %v83 = vld [vmem:[#allocation7 + $0x2] sm:$0x1]
    %v84 = vlaneseq
    %v85 = vshrl.u32 %v84, 7
    %v86 = vsub.s32 0, %v85
    %v87 = vrot.slane %v81, %v86
    %88 = vmatprep.subr.mxu0 0.0
    %89 = vmatpush1.xpose.msra.mxu0 0.0
    %90 = vmatprep.subr.mxu0 0.0
    %91 = vmatpush1.xpose.msra.mxu0 0.0
    %92 = vmatprep.subr.mxu0 0.0
    %93 = vmatpush1.xpose.msra.mxu0 0.0
    %94 = vmatprep.subr.mxu0 0.0
    %95 = vmatpush1.xpose.msra.mxu0 0.0
    %96 = vmatprep.subr.mxu0 0.0
    %97 = vmatpush1.xpose.msra.mxu0 0.0
    %98 = vmatprep.subr.mxu0 0.0
    %99 = vmatpush1.xpose.msra.mxu0 0.0
    %100 = vmatprep.subr.mxu0 0.0
    %101 = vmatpush1.xpose.msra.mxu0 0.0
    %102 = vmatprep.subr.mxu0 0.0
    %103 = vmatpush1.xpose.msra.mxu0 0.0
    %104 = vmatprep.subr.mxu0 0.0
    %105 = vmatpush1.xpose.msra.mxu0 %v80
    %106 = vmatprep.subr.mxu0 0.0
    %107 = vmatpush1.xpose.msra.mxu0 %v79
    %108 = vmatprep.subr.mxu0 0.0
    %109 = vmatpush1.xpose.msra.mxu0 %v78
    %110 = vmatprep.subr.mxu0 0.0
    %111 = vmatpush1.xpose.msra.mxu0 %v77
    %112 = vmatprep.subr.mxu0 0.0
    %113 = vmatpush1.xpose.msra.mxu0 %v76
    %114 = vmatprep.subr.mxu0 0.0
    %115 = vmatpush1.xpose.msra.mxu0 %v75
    %116 = vmatprep.subr.mxu0 0.0
    %117 = vmatpush1.xpose.msra.mxu0 %v74
    %118 = vmatprep.subr.mxu0 0.0
    %119 = vmatpush1.xpose.msra.mxu0 %v73
    %120 = vmatprep.subr.mxu0 0.0
    %121 = vmatpush2.xpose.msra.mxu0 0.0
    %122 = vmatprep.subr.mxu0 0.0
    %123 = vmatpush2.xpose.msra.mxu0 0.0
    %124 = vmatprep.subr.mxu0 0.0
    %125 = vmatpush2.xpose.msra.mxu0 0.0
    %126 = vmatprep.subr.mxu0 0.0
    %127 = vmatpush2.xpose.msra.mxu0 0.0
    %128 = vmatprep.subr.mxu0 0.0
    %129 = vmatpush2.xpose.msra.mxu0 0.0
    %130 = vmatprep.subr.mxu0 0.0
    %131 = vmatpush2.xpose.msra.mxu0 0.0
    %132 = vmatprep.subr.mxu0 0.0
    %133 = vmatpush2.xpose.msra.mxu0 0.0
    %134 = vmatprep.subr.mxu0 0.0
    %135 = vmatpush2.xpose.msra.mxu0 0.0
    %136 = vmatprep.subr.mxu0 0.0
    %137 = vmatpush2.xpose.msra.mxu0 0.0
    %138 = vmatprep.subr.mxu0 0.0
    %139 = vmatpush2.xpose.msra.mxu0 0.0
    %140 = vmatprep.subr.mxu0 0.0
    %141 = vmatpush2.xpose.msra.mxu0 0.0
    %142 = vmatprep.subr.mxu0 0.0
    %143 = vmatpush2.xpose.msra.mxu0 0.0
    %144 = vmatprep.subr.mxu0 0.0
    %145 = vmatpush2.xpose.msra.mxu0 0.0
    %146 = vmatprep.subr.mxu0 0.0
    %147 = vmatpush2.xpose.msra.mxu0 0.0
    %148 = vmatprep.subr.mxu0 0.0
    %149 = vmatpush2.xpose.msra.mxu0 0.0
    %150 = vmatprep.subr.mxu0 0.0
    %151 = vmatpush2.xpose.msra.mxu0 0.0
    %152 = vmatprep.mubr.f32.mxu0 0.0
    %153 = vmatmul.mubr.f32.gmra.mxu0 %v71
    %v154 = vpop.f32.mrf.mxu0
    %v155 = vadd.f32 %v87, %v154
    %v156 = vpop.f32.mrf.mxu0
    %157 = vmatprep.mubr.f32.mxu0 0.0
    %158 = vmatmul.mubr.f32.gmra.mxu0 %v72
    %v159 = vpop.f32.mrf.mxu0
    %v160 = vadd.f32 %v87, %v159
    %v161 = vpop.f32.mrf.mxu0
    %162 = vdwg.mxu0
    %v163 = vld [vmem:[#allocation8] sm:$0xff]
    %v164 = vld [vmem:[#allocation8 + $0x8] sm:$0xff]
    %v165 = vadd.f32 %v155, %v163
    %v166 = vadd.f32 %v160, %v164
    %vm167 = vcmask 523264
    %v168 = vsel %vm167, %v165, 0.0
    %169 = vadd.xlane.f32.xlu0 %v168
    %v170 = vpop.xlane.xlu0 %169
    %v171 = vsel %vm167, %v166, 0.0
    %172 = vadd.xlane.f32.xlu0 %v171
    %v173 = vpop.xlane.xlu0 %172
    %v174 = vrcp.pop 64.0
    %v175 = vmul.f32 %v170, %v174
    %v176 = vmul.f32 %v173, %v174
    %v177 = vsub.f32 %v165, %v175
    %v178 = vsub.f32 %v166, %v176
    %v179 = vmul.f32 %v177, %v177
    %v180 = vmul.f32 %v178, %v178
    %v181 = vsel %vm167, %v179, 0.0
    %182 = vadd.xlane.f32.xlu0 %v181
    %v183 = vpop.xlane.xlu0 %182
    %v184 = vsel %vm167, %v180, 0.0
    %185 = vadd.xlane.f32.xlu0 %v184
    %v186 = vpop.xlane.xlu0 %185
    %v187 = vmul.f32 %v183, %v174
    %v188 = vmul.f32 %v186, %v174
    %v189 = vadd.f32 %v187, 1e-12
    %v190 = vadd.f32 %v188, 1e-12
    %v191 = vrsqrt.pop %v189
    %v192 = vrsqrt.pop %v190
    %v193 = vmul.f32 %v177, %v191
    %v194 = vmul.f32 %v178, %v192
    %v195 = vlaneseq
    %v196 = vshrl.u32 %v195, 7
    %v197 = vsub.s32 0, %v196
    %v198 = vrot.slane %v82, %v197
    %v199 = vmul.f32 %v193, %v198
    %v200 = vmul.f32 %v194, %v198
    %v201 = vlaneseq
    %v202 = vshrl.u32 %v201, 7
    %v203 = vsub.s32 0, %v202
    %v204 = vrot.slane %v83, %v203
    %v205 = vadd.f32 %v199, %v204
    %v206 = vadd.f32 %v200, %v204
    %207 = vst.msk [vmem:[#allocation10] sm:$0xff] %vm167, %v205
    %208 = vst.msk [vmem:[#allocation10 + $0x8] sm:$0xff] %vm167, %v206
    // Predicated region
    $region34: #{tpu_custom_call.1} parent=1 // pred_check
      _
    $region35: #{tpu_custom_call.1} parent=1 // pred_check_branch
      %210 = sbr.rel (0) target = $region37
    $region36: #{tpu_custom_call.1} parent=1 // pred_region
      %s212 = ssub.s32 256, 256
      %213 = vsyncadd [#allocation4], %s212
      %s214 = sshll.u32 [#allocation10], 4
      %s215 = int_to_ptr.vmem [resolvable:$true] %s214
      %220 = dma.vmem_to_hbm [thread:$0]  %s215, 256, %s4, [#allocation4], 128, 128, 8
    $region37: #{tpu_custom_call.1} parent=1 // pred_fallthru
      _
    // Predicated region
    $region38: #{tpu_custom_call.1} parent=1 // pred_check
      _
    $region39: #{tpu_custom_call.1} parent=1 // pred_check_branch
      %222 = sbr.rel (0) target = $region41
    $region40: #{tpu_custom_call.1} parent=1 // pred_region
      %223 = dma.done [#allocation4], 256
    $region41: #{tpu_custom_call.1} parent=1 // pred_fallthru
      _
    %224 = vsyncpa [#allocation3], 1
    %225 = vsyncpa [#allocation6], 1
    %226 = vsyncpa [#allocation9], 1
    %227 = vsyncpa [#allocation4], 1

</llo_original>
